<compile_context>
chip_gen: v5e
topology: v5e:2x2
jax: 0.10.0
libtpu: 0.0.40
codegen_flags: <defaults>
</compile_context>

<pallas_src>
import jax
import jax.numpy as jnp
from jax.experimental import pallas as pl
from jax.experimental.pallas import tpu as pltpu


def _round_up(x, m):
    return (x + m - 1) // m * m


def _pick_tile(total, desired, align):
    """Largest multiple of `align` that divides `total` and is <= desired (>= align)."""
    units = total // align
    max_units = max(1, min(desired // align, units))
    for cand in range(max_units, 0, -1):
        if units % cand == 0:
            return cand * align
    return align


def _pad_cast(a, shape, dtype):
    """Cast then zero-pad `a` up to `shape`; avoids any copy when nothing changes."""
    if a.dtype != jnp.dtype(dtype):
        a = a.astype(dtype)
    pads = tuple((0, t - s) for s, t in zip(a.shape, shape))
    if any(p[1] for p in pads):
        a = jnp.pad(a, pads)
    return a


def _vmem_limit_bytes():
    """Generation-aware scoped VMEM limit (v5e/v6e: 128 MiB phys, v7x: 64 MiB)."""
    try:
        cap = int(pltpu.get_tpu_info().vmem_capacity_bytes)
    except Exception:
        cap = 64 * 1024 * 1024          # conservative (v7x-sized) fallback
    return min(cap * 3 // 4, 100 * 1024 * 1024)


# -----------------------------------------------------------------------------
# Kernels
# -----------------------------------------------------------------------------

def _resident_kernel(x_ref, w_ref, b_ref, o_ref):
    # x_ref: (tm, Kp) | w_ref: (Kp, Dp) VMEM-resident | b_ref: (1, Dp) f32
    acc = jnp.dot(x_ref[...], w_ref[...], preferred_element_type=jnp.float32)
    o_ref[...] = (acc + b_ref[...]).astype(o_ref.dtype)


def _tiled_kernel_f32(x_ref, w_ref, b_ref, o_ref):
    # f32 output: accumulate directly into the (k-resident) output block.
    k = pl.program_id(2)

    @pl.when(k == 0)
    def _():
        o_ref[...] = jnp.zeros_like(o_ref) + b_ref[...]     # bias folded into init

    o_ref[...] += jnp.dot(x_ref[...], w_ref[...], preferred_element_type=jnp.float32)


def _tiled_kernel_acc(x_ref, w_ref, b_ref, o_ref, acc_ref):
    # Narrow output dtype: accumulate in f32 scratch, single cast in the epilogue.
    k = pl.program_id(2)

    @pl.when(k == 0)
    def _():
        acc_ref[...] = jnp.zeros_like(acc_ref) + b_ref[...]

    acc_ref[...] += jnp.dot(x_ref[...], w_ref[...], preferred_element_type=jnp.float32)

    @pl.when(k == pl.num_programs(2) - 1)
    def _():
        o_ref[...] = acc_ref[...].astype(o_ref.dtype)


# -----------------------------------------------------------------------------
# pallas_call wrappers
# -----------------------------------------------------------------------------

def prepare_linear_probe_params(weight, bias, *, mxu_dtype=jnp.bfloat16):
    """Pad + cast + pre-transpose the Linear parameters (prepare once, reuse)."""
    D, N = weight.shape
    Dp = _round_up(D, 128)
    Kp = _round_up(N, 128)
    wt = _pad_cast(weight.T, (Kp, Dp), mxu_dtype)              # [Kp, Dp]
    bp = _pad_cast(bias.reshape(1, D), (1, Dp), jnp.float32)   # [1, Dp]
    return wt, bp


def _forward_resident(xp, wt, bp, B, D, Bp, Dp, Kp, tm, out_dtype, isz, osz,
                      vmem_limit):
    grid = (Bp // tm,)
    bytes_accessed = Bp * Kp * isz + Kp * Dp * isz + Dp * 4 + Bp * Dp * osz
    out = pl.pallas_call(
        _resident_kernel,
        out_shape=jax.ShapeDtypeStruct((Bp, Dp), out_dtype),
        grid_spec=pltpu.PrefetchScalarGridSpec(
            num_scalar_prefetch=0,
            grid=grid,
            in_specs=[
                pl.BlockSpec((tm, Kp), lambda i: (i, 0)),   # x batch tile
                pl.BlockSpec((Kp, Dp), lambda i: (0, 0)),   # weight: DMA'd once, resident
                pl.BlockSpec((1, Dp), lambda i: (0, 0)),    # bias (resident)
            ],
            out_specs=pl.BlockSpec((tm, Dp), lambda i: (i, 0)),
        ),
        compiler_params=pltpu.CompilerParams(
            dimension_semantics=("parallel",),
            vmem_limit_bytes=int(vmem_limit),
        ),
        cost_estimate=pl.CostEstimate(
            flops=int(2 * Bp * Kp * Dp), transcendentals=0,
            bytes_accessed=int(bytes_accessed)),
    )(xp, wt, bp)
    return out[:B, :D]


def _forward_tiled(xp, wt, bp, B, D, Bp, Dp, Kp, tm, tn, tk, out_dtype, isz, osz,
                   vmem_limit):
    grid = (Bp // tm, Dp // tn, Kp // tk)
    f32_out = jnp.dtype(out_dtype) == jnp.dtype(jnp.float32)
    kernel = _tiled_kernel_f32 if f32_out else _tiled_kernel_acc
    scratch = [] if f32_out else [pltpu.VMEM((tm, tn), jnp.float32)]
    # Weight is re-streamed once per batch tile in this path -> count it honestly.
    bytes_accessed = (Bp * Kp * isz
                      + (Bp // tm) * Kp * Dp * isz
                      + Dp * 4
                      + Bp * Dp * osz)
    out = pl.pallas_call(
        kernel,
        out_shape=jax.ShapeDtypeStruct((Bp, Dp), out_dtype),
        grid_spec=pltpu.PrefetchScalarGridSpec(
            num_scalar_prefetch=0,
            grid=grid,
            in_specs=[
                pl.BlockSpec((tm, tk), lambda i, j, k: (i, k)),   # x
                pl.BlockSpec((tk, tn), lambda i, j, k: (k, j)),   # W^T (pre-transposed)
                pl.BlockSpec((1, tn), lambda i, j, k: (0, j)),    # bias
            ],
            out_specs=pl.BlockSpec((tm, tn), lambda i, j, k: (i, j)),
            scratch_shapes=scratch,
        ),
        compiler_params=pltpu.CompilerParams(
            dimension_semantics=("parallel", "parallel", "arbitrary"),
            vmem_limit_bytes=int(vmem_limit),
        ),
        cost_estimate=pl.CostEstimate(
            flops=int(2 * Bp * Kp * Dp), transcendentals=0,
            bytes_accessed=int(bytes_accessed)),
    )(xp, wt, bp)
    return out[:B, :D]


def linear_probe_forward(x, weight, bias, *, mxu_dtype=jnp.bfloat16,
                         tm=256, tn=256, tk=2048, force_tiled=False):
    """y = x.view(B, -1) @ W^T + b   with weight: [D, N], bias: [D].

    mxu_dtype=jnp.bfloat16 halves HBM traffic (accumulation stays f32); pass
    jnp.float32 for bit-closer agreement with the f32 PyTorch module.
    """
    B = x.shape[0]
    xf = x.reshape(B, -1)
    N = xf.shape[1]
    D = weight.shape[0]
    assert weight.shape[1] == N, "Linear in_features must match flattened input"

    out_dtype = x.dtype
    isz = jnp.dtype(mxu_dtype).itemsize
    osz = jnp.dtype(out_dtype).itemsize

    Dp = _round_up(D, 128)
    Kp = _round_up(N, 128)
    Bp = _round_up(B, 8)

    # TODO(synk): in a real deployment cache the prepared (wt, bp) across calls.
    wt, bp = prepare_linear_probe_params(weight, bias, mxu_dtype=mxu_dtype)
    xp = _pad_cast(xf, (Bp, Kp), mxu_dtype)

    vmem_limit = _vmem_limit_bytes()
    budget = int(vmem_limit * 0.7)      # headroom for compiler/internal scratch

    # ---------------- fast path: whole weight resident in VMEM ---------------
    if not force_tiled:
        for cand in sorted({_pick_tile(Bp, d, 8) for d in (tm, 128, 64, 32, 16, 8)},
                           reverse=True):
            need = (2 * cand * Kp * isz        # x blocks (double-buffered)
                    + 2 * Kp * Dp * isz        # weight (constant index; 2 bufs worst case)
                    + 2 * cand * Dp * osz      # output blocks
                    + 2 * Dp * 4)              # bias
            if need <= budget:
                return _forward_resident(xp, wt, bp, B, D, Bp, Dp, Kp, cand,
                                         out_dtype, isz, osz, vmem_limit)

    # ---------------- general path: (B, D, K) tiled matmul -------------------
    tm_b = _pick_tile(Bp, tm, 8)
    tn_b = _pick_tile(Dp, tn, 128)
    tk_b = _pick_tile(Kp, tk, 128)

    def _need(tm_, tn_, tk_):
        return (2 * tm_ * tk_ * isz + 2 * tk_ * tn_ * isz
                + 2 * tm_ * tn_ * osz + tm_ * tn_ * 4 + 2 * tn_ * 4)

    while _need(tm_b, tn_b, tk_b) > budget and tk_b > 128:
        tk_b = _pick_tile(Kp, max(128, tk_b // 2), 128)
    while _need(tm_b, tn_b, tk_b) > budget and tm_b > 8:
        tm_b = _pick_tile(Bp, max(8, tm_b // 2), 8)

    return _forward_tiled(xp, wt, bp, B, D, Bp, Dp, Kp, tm_b, tn_b, tk_b,
                          out_dtype, isz, osz, vmem_limit)


if __name__ == "__main__":
    key = jax.random.PRNGKey(0)

    # ---- Test 1: module-sized shapes (resident-weight fast path) ------------
    B, C, H, W = 2, 4, 16, 16
    N = C * H * W          # n = in_features of ln1
    D = 32                 # d = out_features of ln1
    k1, k2, k3, key = jax.random.split(key, 4)
    x = jax.random.normal(k1, (B, C, H, W), dtype=jnp.float32)
    weight = jax.random.normal(k2, (D, N), dtype=jnp.float32) * 0.02
    bias = jax.random.normal(k3, (D,), dtype=jnp.float32) * 0.02

    out = jax.block_until_ready(linear_probe_forward(x, weight, bias))
    ref = x.reshape(B, -1) @ weight.T + bias
    assert out.shape == (B, D)
    assert jnp.allclose(out, ref, atol=2e-2, rtol=2e-2), \
        float(jnp.max(jnp.abs(out - ref)))

    # ---- Test 2: forced tiled path, f32 output (direct accumulation) --------
    B2, N2, D2 = 16, 2048, 256
    k1, k2, k3, key = jax.random.split(key, 4)
    x2 = jax.random.normal(k1, (B2, N2), dtype=jnp.float32)
    w2 = jax.random.normal(k2, (D2, N2), dtype=jnp.float32) * 0.02
    b2 = jax.random.normal(k3, (D2,), dtype=jnp.float32) * 0.02
    out2 = jax.block_until_ready(
        linear_probe_forward(x2, w2, b2, tk=512, force_tiled=True))
    ref2 = x2 @ w2.T + b2
    assert jnp.allclose(out2, ref2, atol=3e-2, rtol=3e-2), \
        float(jnp.max(jnp.abs(out2 - ref2)))

    # ---- Test 3: forced tiled path, bf16 output (f32 scratch epilogue) ------
    B3, N3, D3 = 8, 1024, 128
    k1, k2, k3, key = jax.random.split(key, 4)
    x3 = jax.random.normal(k1, (B3, N3), dtype=jnp.bfloat16)
    w3 = jax.random.normal(k2, (D3, N3), dtype=jnp.float32) * 0.02
    b3 = jax.random.normal(k3, (D3,), dtype=jnp.float32) * 0.02
    out3 = jax.block_until_ready(
        linear_probe_forward(x3, w3, b3, tk=256, force_tiled=True))
    ref3 = x3.astype(jnp.float32) @ w3.T + b3
    assert jnp.allclose(out3.astype(jnp.float32), ref3, atol=6e-2, rtol=6e-2), \
        float(jnp.max(jnp.abs(out3.astype(jnp.float32) - ref3)))

    print("KERNEL_OK")
</pallas_src>

<mosaic_0001>
module attributes {stable_mosaic.version = 11 : i64} {
  func.func @_resident_kernel(%arg0: i32, %arg1: memref<8x1024xbf16, #tpu.memory_space<vmem>>, %arg2: memref<1024x128xbf16, #tpu.memory_space<vmem>>, %arg3: memref<1x128xf32, #tpu.memory_space<vmem>>, %arg4: memref<8x128xf32, #tpu.memory_space<vmem>>) attributes {dimension_semantics = [#tpu.dimension_semantics<parallel>], iteration_bounds = array<i64: 1>, scalar_prefetch = 0 : i64, scratch_operands = 0 : i64, tpu.core_type = #tpu.core_type<tc>, window_params = [{transform_indices = @transform_0, window_bounds = array<i64: 8, 1024>}, {pipeline_mode = #tpu.pipeline_mode<synchronous>, transform_indices = @transform_1, window_bounds = array<i64: 1024, 128>}, {pipeline_mode = #tpu.pipeline_mode<synchronous>, transform_indices = @transform_2, window_bounds = array<i64: 1, 128>}, {transform_indices = @transform_3, window_bounds = array<i64: 8, 128>}]} {
    %c0 = arith.constant 0 : index
    %c0_0 = arith.constant 0 : index
    %0 = vector.load %arg1[%c0, %c0_0] : memref<8x1024xbf16, #tpu.memory_space<vmem>>, vector<8x1024xbf16>
    %c0_1 = arith.constant 0 : index
    %c0_2 = arith.constant 0 : index
    %1 = vector.load %arg2[%c0_1, %c0_2] : memref<1024x128xbf16, #tpu.memory_space<vmem>>, vector<1024x128xbf16>
    %cst = arith.constant dense<0.000000e+00> : vector<8x128xf32>
    %2 = tpu.matmul %0, %1, %cst {dimension_numbers = #tpu.dot_dimension_numbers<[1], [0], [0], [1], [0, 0, 1, 1], [], []>} : vector<8x1024xbf16>, vector<1024x128xbf16>, vector<8x128xf32> -> vector<8x128xf32>
    %c0_3 = arith.constant 0 : index
    %c0_4 = arith.constant 0 : index
    %3 = vector.load %arg3[%c0_3, %c0_4] : memref<1x128xf32, #tpu.memory_space<vmem>>, vector<1x128xf32>
    %4 = vector.broadcast %3 : vector<1x128xf32> to vector<8x128xf32>
    %5 = arith.addf %2, %4 : vector<8x128xf32>
    %c0_5 = arith.constant 0 : index
    %c0_6 = arith.constant 0 : index
    %6 = vector.load %arg4[%c0_5, %c0_6] : memref<8x128xf32, #tpu.memory_space<vmem>>, vector<8x128xf32>
    tpu.vector_store %arg4[%c0_5, %c0_6], %5 {strides = array<i32>} : memref<8x128xf32, #tpu.memory_space<vmem>>, vector<8x128xf32>,
    return
  }
  func.func @transform_0(%arg0: i32) -> (i32, i32) {
    %c0_i32 = arith.constant 0 : i32
    %c0_i32_0 = arith.constant 0 : i32
    return %arg0, %c0_i32 : i32, i32
  }
  func.func @transform_1(%arg0: i32) -> (i32, i32) {
    %c0_i32 = arith.constant 0 : i32
    %c0_i32_0 = arith.constant 0 : i32
    %c0_i32_1 = arith.constant 0 : i32
    return %c0_i32, %c0_i32_0 : i32, i32
  }
  func.func @transform_2(%arg0: i32) -> (i32, i32) {
    %c0_i32 = arith.constant 0 : i32
    %c0_i32_0 = arith.constant 0 : i32
    %c0_i32_1 = arith.constant 0 : i32
    return %c0_i32, %c0_i32_0 : i32, i32
  }
  func.func @transform_3(%arg0: i32) -> (i32, i32) {
    %c0_i32 = arith.constant 0 : i32
    %c0_i32_0 = arith.constant 0 : i32
    return %arg0, %c0_i32 : i32, i32
  }
}

</mosaic_0001>

<llo_original>
// kernel: tpu_custom_call.1
$region0: #{tpu_custom_call.1}
  #allocation0 [shape = 'u32[]', space=smem, size = 0x4, offset = 0x4, fixed_abs, tag = 'smem constant byte address 0x4 - core index']
  #allocation1 [shape = 'u32[72,128]{1,0:T(1,128)}', space=vmem, size = 0x9000, scoped, tag = 'internal scratch']
  %s0 = inlined_call_operand.hbm [shape: bf16[8,1024], index: 0, kind: input, shape index: {}]
  %s1 = inlined_call_operand.hbm [shape: bf16[1024,128], index: 1, kind: input, shape index: {}]
  %s2 = inlined_call_operand.vmem [shape: f32[1,128], index: 2, kind: input, shape index: {}]
  %s3 = inlined_call_operand.hbm [shape: f32[8,128], index: 3, kind: output, shape index: {}]
  %s4 = sld [smem:[#allocation0]]
  $region30: #{tpu_custom_call.1} parent=0
    _
  %s6 = ssub.s32 1, %s4
  %s7 = scalar_select 0, %s6, %s4
  $region1: #{tpu_custom_call.1} parent=0
    #allocation2 [shape = 'u8[16384]{0}', space=vmem, size = 0x4000, scoped, tag = 'input window, operand 0, single buffered']
    #allocation3 [shape = 's32[1]{0}', space=sflag, size = 0x4, scoped, tag = 'scoped memory for tpu_custom_call.1']
    #allocation4 [shape = 's32[1]{0}', space=sflag, size = 0x4, scoped, tag = 'scoped memory for tpu_custom_call.1']
    #allocation5 [shape = 'u8[262144]{0}', space=vmem, size = 0x40000, scoped, tag = 'input window, operand 1, single buffered']
    #allocation6 [shape = 's32[1]{0}', space=sflag, size = 0x4, scoped, tag = 'scoped memory for tpu_custom_call.1']
    #allocation7 [shape = 'u8[4096]{0}', space=vmem, size = 0x1000, scoped, tag = 'output window, operand 0, single buffered']
    %8 = vsyncpa [#allocation3], 0
    %9 = vsyncpa [#allocation6], 0
    %10 = vsyncpa [#allocation4], 0
    // Predicated region
    $region2: #{tpu_custom_call.1} parent=1 // pred_check
      _
    $region3: #{tpu_custom_call.1} parent=1 // pred_check_branch
      %12 = sbr.rel (0) target = $region5
    $region4: #{tpu_custom_call.1} parent=1 // pred_region
      %14 = vsyncadd [#allocation3], 0
      %s16 = sshll.u32 %s0, 4
      %s17 = int_to_ptr.hbm [resolvable:$true] %s16
      %s18 = sshll.u32 [#allocation2], 4
      %s19 = int_to_ptr.vmem [resolvable:$true] %s18
      %21 = dma.hbm_to_vmem [thread:$0]  %s17, 512, %s19, [#allocation3]
    $region5: #{tpu_custom_call.1} parent=1 // pred_fallthru
      _
    // Predicated region
    $region6: #{tpu_custom_call.1} parent=1 // pred_check
      _
    $region7: #{tpu_custom_call.1} parent=1 // pred_check_branch
      %23 = sbr.rel (0) target = $region9
    $region8: #{tpu_custom_call.1} parent=1 // pred_region
      %25 = vsyncadd [#allocation6], 0
      %s26 = sshll.u32 %s1, 4
      %s27 = int_to_ptr.hbm [resolvable:$true] %s26
      %s28 = sshll.u32 [#allocation5], 4
      %s29 = int_to_ptr.vmem [resolvable:$true] %s28
      %34 = dma.hbm_to_vmem [thread:$0]  %s27, 8192, %s29, [#allocation6], 64, 64, 4
    $region9: #{tpu_custom_call.1} parent=1 // pred_fallthru
      _
    // Predicated region
    $region10: #{tpu_custom_call.1} parent=1 // pred_check
      _
    $region11: #{tpu_custom_call.1} parent=1 // pred_check_branch
      %36 = sbr.rel (0) target = $region13
    $region12: #{tpu_custom_call.1} parent=1 // pred_region
      _
    $region13: #{tpu_custom_call.1} parent=1 // pred_fallthru
      _
    // Predicated region
    $region14: #{tpu_custom_call.1} parent=1 // pred_check
      _
    $region15: #{tpu_custom_call.1} parent=1 // pred_check_branch
      %38 = sbr.rel (0) target = $region17
    $region16: #{tpu_custom_call.1} parent=1 // pred_region
      %40 = dma.done [#allocation3], 512
    $region17: #{tpu_custom_call.1} parent=1 // pred_fallthru
      _
    // Predicated region
    $region18: #{tpu_custom_call.1} parent=1 // pred_check
      _
    $region19: #{tpu_custom_call.1} parent=1 // pred_check_branch
      %42 = sbr.rel (0) target = $region21
    $region20: #{tpu_custom_call.1} parent=1 // pred_region
      %44 = dma.done [#allocation6], 8192
    $region21: #{tpu_custom_call.1} parent=1 // pred_fallthru
      _
    %v45 = vld [vmem:[#allocation2] sm:$0xff]
    %v46 = vld [vmem:[#allocation2 + $0x8] sm:$0xff]
    %v47 = vld [vmem:[#allocation2 + $0x10] sm:$0xff]
    %v48 = vld [vmem:[#allocation2 + $0x18] sm:$0xff]
    %v49 = vld [vmem:[#allocation5] sm:$0xf]
    %v50 = vld [vmem:[#allocation5 + $0x4] sm:$0xf]
    %v51 = vld [vmem:[#allocation5 + $0x8] sm:$0xf]
    %v52 = vld [vmem:[#allocation5 + $0xc] sm:$0xf]
    %v53 = vld [vmem:[#allocation5 + $0x10] sm:$0xf]
    %v54 = vld [vmem:[#allocation5 + $0x14] sm:$0xf]
    %v55 = vld [vmem:[#allocation5 + $0x18] sm:$0xf]
    %v56 = vld [vmem:[#allocation5 + $0x1c] sm:$0xf]
    %v57 = vld [vmem:[#allocation5 + $0x20] sm:$0xf]
    %v58 = vld [vmem:[#allocation5 + $0x24] sm:$0xf]
    %v59 = vld [vmem:[#allocation5 + $0x28] sm:$0xf]
    %v60 = vld [vmem:[#allocation5 + $0x2c] sm:$0xf]
    %v61 = vld [vmem:[#allocation5 + $0x30] sm:$0xf]
    %v62 = vld [vmem:[#allocation5 + $0x34] sm:$0xf]
    %v63 = vld [vmem:[#allocation5 + $0x38] sm:$0xf]
    %v64 = vld [vmem:[#allocation5 + $0x3c] sm:$0xf]
    %v65 = vld [vmem:[#allocation5 + $0x40] sm:$0xf]
    %v66 = vld [vmem:[#allocation5 + $0x44] sm:$0xf]
    %v67 = vld [vmem:[#allocation5 + $0x48] sm:$0xf]
    %v68 = vld [vmem:[#allocation5 + $0x4c] sm:$0xf]
    %v69 = vld [vmem:[#allocation5 + $0x50] sm:$0xf]
    %v70 = vld [vmem:[#allocation5 + $0x54] sm:$0xf]
    %v71 = vld [vmem:[#allocation5 + $0x58] sm:$0xf]
    %v72 = vld [vmem:[#allocation5 + $0x5c] sm:$0xf]
    %v73 = vld [vmem:[#allocation5 + $0x60] sm:$0xf]
    %v74 = vld [vmem:[#allocation5 + $0x64] sm:$0xf]
    %v75 = vld [vmem:[#allocation5 + $0x68] sm:$0xf]
    %v76 = vld [vmem:[#allocation5 + $0x6c] sm:$0xf]
    %v77 = vld [vmem:[#allocation5 + $0x70] sm:$0xf]
    %v78 = vld [vmem:[#allocation5 + $0x74] sm:$0xf]
    %v79 = vld [vmem:[#allocation5 + $0x78] sm:$0xf]
    %v80 = vld [vmem:[#allocation5 + $0x7c] sm:$0xf]
    %v81 = vld [vmem:[#allocation5 + $0x80] sm:$0xf]
    %v82 = vld [vmem:[#allocation5 + $0x84] sm:$0xf]
    %v83 = vld [vmem:[#allocation5 + $0x88] sm:$0xf]
    %v84 = vld [vmem:[#allocation5 + $0x8c] sm:$0xf]
    %v85 = vld [vmem:[#allocation5 + $0x90] sm:$0xf]
    %v86 = vld [vmem:[#allocation5 + $0x94] sm:$0xf]
    %v87 = vld [vmem:[#allocation5 + $0x98] sm:$0xf]
    %v88 = vld [vmem:[#allocation5 + $0x9c] sm:$0xf]
    %v89 = vld [vmem:[#allocation5 + $0xa0] sm:$0xf]
    %v90 = vld [vmem:[#allocation5 + $0xa4] sm:$0xf]
    %v91 = vld [vmem:[#allocation5 + $0xa8] sm:$0xf]
    %v92 = vld [vmem:[#allocation5 + $0xac] sm:$0xf]
    %v93 = vld [vmem:[#allocation5 + $0xb0] sm:$0xf]
    %v94 = vld [vmem:[#allocation5 + $0xb4] sm:$0xf]
    %v95 = vld [vmem:[#allocation5 + $0xb8] sm:$0xf]
    %v96 = vld [vmem:[#allocation5 + $0xbc] sm:$0xf]
    %v97 = vld [vmem:[#allocation5 + $0xc0] sm:$0xf]
    %v98 = vld [vmem:[#allocation5 + $0xc4] sm:$0xf]
    %v99 = vld [vmem:[#allocation5 + $0xc8] sm:$0xf]
    %v100 = vld [vmem:[#allocation5 + $0xcc] sm:$0xf]
    %v101 = vld [vmem:[#allocation5 + $0xd0] sm:$0xf]
    %v102 = vld [vmem:[#allocation5 + $0xd4] sm:$0xf]
    %v103 = vld [vmem:[#allocation5 + $0xd8] sm:$0xf]
    %v104 = vld [vmem:[#allocation5 + $0xdc] sm:$0xf]
    %v105 = vld [vmem:[#allocation5 + $0xe0] sm:$0xf]
    %v106 = vld [vmem:[#allocation5 + $0xe4] sm:$0xf]
    %v107 = vld [vmem:[#allocation5 + $0xe8] sm:$0xf]
    %v108 = vld [vmem:[#allocation5 + $0xec] sm:$0xf]
    %v109 = vld [vmem:[#allocation5 + $0xf0] sm:$0xf]
    %v110 = vld [vmem:[#allocation5 + $0xf4] sm:$0xf]
    %v111 = vld [vmem:[#allocation5 + $0xf8] sm:$0xf]
    %v112 = vld [vmem:[#allocation5 + $0xfc] sm:$0xf]
    %v113 = vld [vmem:[#allocation5 + $0x100] sm:$0xf]
    %v114 = vld [vmem:[#allocation5 + $0x104] sm:$0xf]
    %v115 = vld [vmem:[#allocation5 + $0x108] sm:$0xf]
    %v116 = vld [vmem:[#allocation5 + $0x10c] sm:$0xf]
    %v117 = vld [vmem:[#allocation5 + $0x110] sm:$0xf]
    %v118 = vld [vmem:[#allocation5 + $0x114] sm:$0xf]
    %v119 = vld [vmem:[#allocation5 + $0x118] sm:$0xf]
    %v120 = vld [vmem:[#allocation5 + $0x11c] sm:$0xf]
    %v121 = vld [vmem:[#allocation5 + $0x120] sm:$0xf]
    %v122 = vld [vmem:[#allocation5 + $0x124] sm:$0xf]
    %v123 = vld [vmem:[#allocation5 + $0x128] sm:$0xf]
    %v124 = vld [vmem:[#allocation5 + $0x12c] sm:$0xf]
    %v125 = vld [vmem:[#allocation5 + $0x130] sm:$0xf]
    %v126 = vld [vmem:[#allocation5 + $0x134] sm:$0xf]
    %v127 = vld [vmem:[#allocation5 + $0x138] sm:$0xf]
    %v128 = vld [vmem:[#allocation5 + $0x13c] sm:$0xf]
    %v129 = vld [vmem:[#allocation5 + $0x140] sm:$0xf]
    %v130 = vld [vmem:[#allocation5 + $0x144] sm:$0xf]
    %v131 = vld [vmem:[#allocation5 + $0x148] sm:$0xf]
    %v132 = vld [vmem:[#allocation5 + $0x14c] sm:$0xf]
    %v133 = vld [vmem:[#allocation5 + $0x150] sm:$0xf]
    %v134 = vld [vmem:[#allocation5 + $0x154] sm:$0xf]
    %v135 = vld [vmem:[#allocation5 + $0x158] sm:$0xf]
    %v136 = vld [vmem:[#allocation5 + $0x15c] sm:$0xf]
    %v137 = vld [vmem:[#allocation5 + $0x160] sm:$0xf]
    %v138 = vld [vmem:[#allocation5 + $0x164] sm:$0xf]
    %v139 = vld [vmem:[#allocation5 + $0x168] sm:$0xf]
    %v140 = vld [vmem:[#allocation5 + $0x16c] sm:$0xf]
    %v141 = vld [vmem:[#allocation5 + $0x170] sm:$0xf]
    %v142 = vld [vmem:[#allocation5 + $0x174] sm:$0xf]
    %v143 = vld [vmem:[#allocation5 + $0x178] sm:$0xf]
    %v144 = vld [vmem:[#allocation5 + $0x17c] sm:$0xf]
    %v145 = vld [vmem:[#allocation5 + $0x180] sm:$0xf]
    %v146 = vld [vmem:[#allocation5 + $0x184] sm:$0xf]
    %v147 = vld [vmem:[#allocation5 + $0x188] sm:$0xf]
    %v148 = vld [vmem:[#allocation5 + $0x18c] sm:$0xf]
    %v149 = vld [vmem:[#allocation5 + $0x190] sm:$0xf]
    %v150 = vld [vmem:[#allocation5 + $0x194] sm:$0xf]
    %v151 = vld [vmem:[#allocation5 + $0x198] sm:$0xf]
    %v152 = vld [vmem:[#allocation5 + $0x19c] sm:$0xf]
    %v153 = vld [vmem:[#allocation5 + $0x1a0] sm:$0xf]
    %v154 = vld [vmem:[#allocation5 + $0x1a4] sm:$0xf]
    %v155 = vld [vmem:[#allocation5 + $0x1a8] sm:$0xf]
    %v156 = vld [vmem:[#allocation5 + $0x1ac] sm:$0xf]
    %v157 = vld [vmem:[#allocation5 + $0x1b0] sm:$0xf]
    %v158 = vld [vmem:[#allocation5 + $0x1b4] sm:$0xf]
    %v159 = vld [vmem:[#allocation5 + $0x1b8] sm:$0xf]
    %v160 = vld [vmem:[#allocation5 + $0x1bc] sm:$0xf]
    %v161 = vld [vmem:[#allocation5 + $0x1c0] sm:$0xf]
    %v162 = vld [vmem:[#allocation5 + $0x1c4] sm:$0xf]
    %v163 = vld [vmem:[#allocation5 + $0x1c8] sm:$0xf]
    %v164 = vld [vmem:[#allocation5 + $0x1cc] sm:$0xf]
    %v165 = vld [vmem:[#allocation5 + $0x1d0] sm:$0xf]
    %v166 = vld [vmem:[#allocation5 + $0x1d4] sm:$0xf]
    %v167 = vld [vmem:[#allocation5 + $0x1d8] sm:$0xf]
    %v168 = vld [vmem:[#allocation5 + $0x1dc] sm:$0xf]
    %v169 = vld [vmem:[#allocation5 + $0x1e0] sm:$0xf]
    %v170 = vld [vmem:[#allocation5 + $0x1e4] sm:$0xf]
    %v171 = vld [vmem:[#allocation5 + $0x1e8] sm:$0xf]
    %v172 = vld [vmem:[#allocation5 + $0x1ec] sm:$0xf]
    %v173 = vld [vmem:[#allocation5 + $0x1f0] sm:$0xf]
    %v174 = vld [vmem:[#allocation5 + $0x1f4] sm:$0xf]
    %v175 = vld [vmem:[#allocation5 + $0x1f8] sm:$0xf]
    %v176 = vld [vmem:[#allocation5 + $0x1fc] sm:$0xf]
    %v177 = vld [vmem:[%s2] sm:$0x1]
    %v179 = vperm.slane %v177, 0
    %v185 = vunpack.c.l.b16 %v45
    %v186 = vunpack.c.h.b16 %v45
    %v187 = vunpack.c.l.b16 %v46
    %v188 = vunpack.c.h.b16 %v46
    %v189 = vunpack.c.l.b16 %v47
    %v190 = vunpack.c.h.b16 %v47
    %v191 = vunpack.c.l.b16 %v48
    %v192 = vunpack.c.h.b16 %v48
    %v193 = vpack.c.b16 %v185, %v185
    %v194 = vpack.c.b16 %v186, %v186
    %v195 = vpack.c.b16 %v187, %v187
    %v196 = vpack.c.b16 %v188, %v188
    %v197 = vpack.c.b16 %v189, %v189
    %v198 = vpack.c.b16 %v190, %v190
    %v199 = vpack.c.b16 %v191, %v191
    %v200 = vpack.c.b16 %v192, %v192
    %v337 = vunpack.c.l.b16 %v49
    %v338 = vunpack.c.l.b16 %v50
    %v339 = vunpack.c.l.b16 %v51
    %v340 = vunpack.c.l.b16 %v52
    %v341 = vunpack.c.l.b16 %v53
    %v342 = vunpack.c.l.b16 %v54
    %v343 = vunpack.c.l.b16 %v55
    %v344 = vunpack.c.l.b16 %v56
    %v345 = vunpack.c.l.b16 %v57
    %v346 = vunpack.c.l.b16 %v58
    %v347 = vunpack.c.l.b16 %v59
    %v348 = vunpack.c.l.b16 %v60
    %v349 = vunpack.c.l.b16 %v61
    %v350 = vunpack.c.l.b16 %v62
    %v351 = vunpack.c.l.b16 %v63
    %v352 = vunpack.c.l.b16 %v64
    %v353 = vunpack.c.l.b16 %v65
    %v354 = vunpack.c.l.b16 %v66
    %v355 = vunpack.c.l.b16 %v67
    %v356 = vunpack.c.l.b16 %v68
    %v357 = vunpack.c.l.b16 %v69
    %v358 = vunpack.c.l.b16 %v70
    %v359 = vunpack.c.l.b16 %v71
    %v360 = vunpack.c.l.b16 %v72
    %v361 = vunpack.c.l.b16 %v73
    %v362 = vunpack.c.l.b16 %v74
    %v363 = vunpack.c.l.b16 %v75
    %v364 = vunpack.c.l.b16 %v76
    %v365 = vunpack.c.l.b16 %v77
    %v366 = vunpack.c.l.b16 %v78
    %v367 = vunpack.c.l.b16 %v79
    %v368 = vunpack.c.l.b16 %v80
    %v369 = vunpack.c.l.b16 %v81
    %v370 = vunpack.c.l.b16 %v82
    %v371 = vunpack.c.l.b16 %v83
    %v372 = vunpack.c.l.b16 %v84
    %v373 = vunpack.c.l.b16 %v85
    %v374 = vunpack.c.l.b16 %v86
    %v375 = vunpack.c.l.b16 %v87
    %v376 = vunpack.c.l.b16 %v88
    %v377 = vunpack.c.l.b16 %v89
    %v378 = vunpack.c.l.b16 %v90
    %v379 = vunpack.c.l.b16 %v91
    %v380 = vunpack.c.l.b16 %v92
    %v381 = vunpack.c.l.b16 %v93
    %v382 = vunpack.c.l.b16 %v94
    %v383 = vunpack.c.l.b16 %v95
    %v384 = vunpack.c.l.b16 %v96
    %v385 = vunpack.c.l.b16 %v97
    %v386 = vunpack.c.l.b16 %v98
    %v387 = vunpack.c.l.b16 %v99
    %v388 = vunpack.c.l.b16 %v100
    %v389 = vunpack.c.l.b16 %v101
    %v390 = vunpack.c.l.b16 %v102
    %v391 = vunpack.c.l.b16 %v103
    %v392 = vunpack.c.l.b16 %v104
    %v393 = vunpack.c.l.b16 %v105
    %v394 = vunpack.c.l.b16 %v106
    %v395 = vunpack.c.l.b16 %v107
    %v396 = vunpack.c.l.b16 %v108
    %v397 = vunpack.c.l.b16 %v109
    %v398 = vunpack.c.l.b16 %v110
    %v399 = vunpack.c.l.b16 %v111
    %v400 = vunpack.c.l.b16 %v112
    %v401 = vunpack.c.l.b16 %v113
    %v402 = vunpack.c.l.b16 %v114
    %v403 = vunpack.c.l.b16 %v115
    %v404 = vunpack.c.l.b16 %v116
    %v405 = vunpack.c.l.b16 %v117
    %v406 = vunpack.c.l.b16 %v118
    %v407 = vunpack.c.l.b16 %v119
    %v408 = vunpack.c.l.b16 %v120
    %v409 = vunpack.c.l.b16 %v121
    %v410 = vunpack.c.l.b16 %v122
    %v411 = vunpack.c.l.b16 %v123
    %v412 = vunpack.c.l.b16 %v124
    %v413 = vunpack.c.l.b16 %v125
    %v414 = vunpack.c.l.b16 %v126
    %v415 = vunpack.c.l.b16 %v127
    %v416 = vunpack.c.l.b16 %v128
    %v417 = vunpack.c.l.b16 %v129
    %v418 = vunpack.c.l.b16 %v130
    %v419 = vunpack.c.l.b16 %v131
    %v420 = vunpack.c.l.b16 %v132
    %v421 = vunpack.c.l.b16 %v133
    %v422 = vunpack.c.l.b16 %v134
    %v423 = vunpack.c.l.b16 %v135
    %v424 = vunpack.c.l.b16 %v136
    %v425 = vunpack.c.l.b16 %v137
    %v426 = vunpack.c.l.b16 %v138
    %v427 = vunpack.c.l.b16 %v139
    %v428 = vunpack.c.l.b16 %v140
    %v429 = vunpack.c.l.b16 %v141
    %v430 = vunpack.c.l.b16 %v142
    %v431 = vunpack.c.l.b16 %v143
    %v432 = vunpack.c.l.b16 %v144
    %v433 = vunpack.c.l.b16 %v145
    %v434 = vunpack.c.l.b16 %v146
    %v435 = vunpack.c.l.b16 %v147
    %v436 = vunpack.c.l.b16 %v148
    %v437 = vunpack.c.l.b16 %v149
    %v438 = vunpack.c.l.b16 %v150
    %v439 = vunpack.c.l.b16 %v151
    %v440 = vunpack.c.l.b16 %v152
    %v441 = vunpack.c.l.b16 %v153
    %v442 = vunpack.c.l.b16 %v154
    %v443 = vunpack.c.l.b16 %v155
    %v444 = vunpack.c.l.b16 %v156
    %v445 = vunpack.c.l.b16 %v157
    %v446 = vunpack.c.l.b16 %v158
    %v447 = vunpack.c.l.b16 %v159
    %v448 = vunpack.c.l.b16 %v160
    %v449 = vunpack.c.l.b16 %v161
    %v450 = vunpack.c.l.b16 %v162
    %v451 = vunpack.c.l.b16 %v163
    %v452 = vunpack.c.l.b16 %v164
    %v453 = vunpack.c.l.b16 %v165
    %v454 = vunpack.c.l.b16 %v166
    %v455 = vunpack.c.l.b16 %v167
    %v456 = vunpack.c.l.b16 %v168
    %v457 = vunpack.c.l.b16 %v169
    %v458 = vunpack.c.l.b16 %v170
    %v459 = vunpack.c.l.b16 %v171
    %v460 = vunpack.c.l.b16 %v172
    %v461 = vunpack.c.l.b16 %v173
    %v462 = vunpack.c.l.b16 %v174
    %v463 = vunpack.c.l.b16 %v175
    %v464 = vunpack.c.l.b16 %v176
    %v465 = vpack.c.b16 %v338, %v337
    %v466 = vpack.c.b16 %v340, %v339
    %v467 = vpack.c.b16 %v342, %v341
    %v468 = vpack.c.b16 %v344, %v343
    %v469 = vpack.c.b16 %v346, %v345
    %v470 = vpack.c.b16 %v348, %v347
    %v471 = vpack.c.b16 %v350, %v349
    %v472 = vpack.c.b16 %v352, %v351
    %v473 = vpack.c.b16 %v354, %v353
    %v474 = vpack.c.b16 %v356, %v355
    %v475 = vpack.c.b16 %v358, %v357
    %v476 = vpack.c.b16 %v360, %v359
    %v477 = vpack.c.b16 %v362, %v361
    %v478 = vpack.c.b16 %v364, %v363
    %v479 = vpack.c.b16 %v366, %v365
    %v480 = vpack.c.b16 %v368, %v367
    %v481 = vpack.c.b16 %v370, %v369
    %v482 = vpack.c.b16 %v372, %v371
    %v483 = vpack.c.b16 %v374, %v373
    %v484 = vpack.c.b16 %v376, %v375
    %v485 = vpack.c.b16 %v378, %v377
    %v486 = vpack.c.b16 %v380, %v379
    %v487 = vpack.c.b16 %v382, %v381
    %v488 = vpack.c.b16 %v384, %v383
    %v489 = vpack.c.b16 %v386, %v385
    %v490 = vpack.c.b16 %v388, %v387
    %v491 = vpack.c.b16 %v390, %v389
    %v492 = vpack.c.b16 %v392, %v391
    %v493 = vpack.c.b16 %v394, %v393
    %v494 = vpack.c.b16 %v396, %v395
    %v495 = vpack.c.b16 %v398, %v397
    %v496 = vpack.c.b16 %v400, %v399
    %v497 = vpack.c.b16 %v402, %v401
    %v498 = vpack.c.b16 %v404, %v403
    %v499 = vpack.c.b16 %v406, %v405
    %v500 = vpack.c.b16 %v408, %v407
    %v501 = vpack.c.b16 %v410, %v409
    %v502 = vpack.c.b16 %v412, %v411
    %v503 = vpack.c.b16 %v414, %v413
    %v504 = vpack.c.b16 %v416, %v415
    %v505 = vpack.c.b16 %v418, %v417
    %v506 = vpack.c.b16 %v420, %v419
    %v507 = vpack.c.b16 %v422, %v421
    %v508 = vpack.c.b16 %v424, %v423
    %v509 = vpack.c.b16 %v426, %v425
    %v510 = vpack.c.b16 %v428, %v427
    %v511 = vpack.c.b16 %v430, %v429
    %v512 = vpack.c.b16 %v432, %v431
    %v513 = vpack.c.b16 %v434, %v433
    %v514 = vpack.c.b16 %v436, %v435
    %v515 = vpack.c.b16 %v438, %v437
    %v516 = vpack.c.b16 %v440, %v439
    %v517 = vpack.c.b16 %v442, %v441
    %v518 = vpack.c.b16 %v444, %v443
    %v519 = vpack.c.b16 %v446, %v445
    %v520 = vpack.c.b16 %v448, %v447
    %v521 = vpack.c.b16 %v450, %v449
    %v522 = vpack.c.b16 %v452, %v451
    %v523 = vpack.c.b16 %v454, %v453
    %v524 = vpack.c.b16 %v456, %v455
    %v525 = vpack.c.b16 %v458, %v457
    %v526 = vpack.c.b16 %v460, %v459
    %v527 = vpack.c.b16 %v462, %v461
    %v528 = vpack.c.b16 %v464, %v463
    %593 = vmatpush.bf16.msra.mxu0 %v472
    %594 = vmatpush.bf16.msra.mxu0 %v471
    %595 = vmatpush.bf16.msra.mxu0 %v470
    %596 = vmatpush.bf16.msra.mxu0 %v469
    %597 = vmatpush.bf16.msra.mxu0 %v468
    %598 = vmatpush.bf16.msra.mxu0 %v467
    %599 = vmatpush.bf16.msra.mxu0 %v466
    %600 = vmatpush.bf16.msra.mxu0 %v465
    %601 = vmatmul.bf16.gmra.mxu0 %v193
    %v602 = vpop.f32.mrf.mxu0
    %v603 = vadd.f32 %v179, %v602
    %v604 = vpop.f32.mrf.mxu0
    %605 = vdwg.mxu0
    %606 = vmatpush.bf16.msra.mxu0 %v480
    %607 = vmatpush.bf16.msra.mxu0 %v479
    %608 = vmatpush.bf16.msra.mxu0 %v478
    %609 = vmatpush.bf16.msra.mxu0 %v477
    %610 = vmatpush.bf16.msra.mxu0 %v476
    %611 = vmatpush.bf16.msra.mxu0 %v475
    %612 = vmatpush.bf16.msra.mxu0 %v474
    %613 = vmatpush.bf16.msra.mxu0 %v473
    %614 = vmatmul.bf16.gmra.mxu0 %v194
    %v615 = vpop.f32.mrf.mxu0
    %v616 = vadd.f32 %v603, %v615
    %v617 = vpop.f32.mrf.mxu0
    %618 = vdwg.mxu0
    %619 = vmatpush.bf16.msra.mxu0 %v488
    %620 = vmatpush.bf16.msra.mxu0 %v487
    %621 = vmatpush.bf16.msra.mxu0 %v486
    %622 = vmatpush.bf16.msra.mxu0 %v485
    %623 = vmatpush.bf16.msra.mxu0 %v484
    %624 = vmatpush.bf16.msra.mxu0 %v483
    %625 = vmatpush.bf16.msra.mxu0 %v482
    %626 = vmatpush.bf16.msra.mxu0 %v481
    %627 = vmatmul.bf16.gmra.mxu0 %v195
    %v628 = vpop.f32.mrf.mxu0
    %v629 = vadd.f32 %v616, %v628
    %v630 = vpop.f32.mrf.mxu0
    %631 = vdwg.mxu0
    %632 = vmatpush.bf16.msra.mxu0 %v496
    %633 = vmatpush.bf16.msra.mxu0 %v495
    %634 = vmatpush.bf16.msra.mxu0 %v494
    %635 = vmatpush.bf16.msra.mxu0 %v493
    %636 = vmatpush.bf16.msra.mxu0 %v492
    %637 = vmatpush.bf16.msra.mxu0 %v491
    %638 = vmatpush.bf16.msra.mxu0 %v490
    %639 = vmatpush.bf16.msra.mxu0 %v489
    %640 = vmatmul.bf16.gmra.mxu0 %v196
    %v641 = vpop.f32.mrf.mxu0
    %v642 = vadd.f32 %v629, %v641
    %v643 = vpop.f32.mrf.mxu0
    %644 = vdwg.mxu0
    %645 = vmatpush.bf16.msra.mxu0 %v504
    %646 = vmatpush.bf16.msra.mxu0 %v503
    %647 = vmatpush.bf16.msra.mxu0 %v502
    %648 = vmatpush.bf16.msra.mxu0 %v501
    %649 = vmatpush.bf16.msra.mxu0 %v500
    %650 = vmatpush.bf16.msra.mxu0 %v499
    %651 = vmatpush.bf16.msra.mxu0 %v498
    %652 = vmatpush.bf16.msra.mxu0 %v497
    %653 = vmatmul.bf16.gmra.mxu0 %v197
    %v654 = vpop.f32.mrf.mxu0
    %v655 = vadd.f32 %v642, %v654
    %v656 = vpop.f32.mrf.mxu0
    %657 = vdwg.mxu0
    %658 = vmatpush.bf16.msra.mxu0 %v512
    %659 = vmatpush.bf16.msra.mxu0 %v511
    %660 = vmatpush.bf16.msra.mxu0 %v510
    %661 = vmatpush.bf16.msra.mxu0 %v509
    %662 = vmatpush.bf16.msra.mxu0 %v508
    %663 = vmatpush.bf16.msra.mxu0 %v507
    %664 = vmatpush.bf16.msra.mxu0 %v506
    %665 = vmatpush.bf16.msra.mxu0 %v505
    %666 = vmatmul.bf16.gmra.mxu0 %v198
    %v667 = vpop.f32.mrf.mxu0
    %v668 = vadd.f32 %v655, %v667
    %v669 = vpop.f32.mrf.mxu0
    %670 = vdwg.mxu0
    %671 = vmatpush.bf16.msra.mxu0 %v520
    %672 = vmatpush.bf16.msra.mxu0 %v519
    %673 = vmatpush.bf16.msra.mxu0 %v518
    %674 = vmatpush.bf16.msra.mxu0 %v517
    %675 = vmatpush.bf16.msra.mxu0 %v516
    %676 = vmatpush.bf16.msra.mxu0 %v515
    %677 = vmatpush.bf16.msra.mxu0 %v514
    %678 = vmatpush.bf16.msra.mxu0 %v513
    %679 = vmatmul.bf16.gmra.mxu0 %v199
    %v680 = vpop.f32.mrf.mxu0
    %v681 = vadd.f32 %v668, %v680
    %v682 = vpop.f32.mrf.mxu0
    %683 = vdwg.mxu0
    %684 = vmatpush.bf16.msra.mxu0 %v528
    %685 = vmatpush.bf16.msra.mxu0 %v527
    %686 = vmatpush.bf16.msra.mxu0 %v526
    %687 = vmatpush.bf16.msra.mxu0 %v525
    %688 = vmatpush.bf16.msra.mxu0 %v524
    %689 = vmatpush.bf16.msra.mxu0 %v523
    %690 = vmatpush.bf16.msra.mxu0 %v522
    %691 = vmatpush.bf16.msra.mxu0 %v521
    %692 = vmatmul.bf16.gmra.mxu0 %v200
    %v693 = vpop.f32.mrf.mxu0
    %v694 = vadd.f32 %v681, %v693
    %v695 = vpop.f32.mrf.mxu0
    %696 = vdwg.mxu0
    %697 = vst [vmem:[#allocation7] sm:$0xff] %v694
    // Predicated region
    $region22: #{tpu_custom_call.1} parent=1 // pred_check
      _
    $region23: #{tpu_custom_call.1} parent=1 // pred_check_branch
      %699 = sbr.rel (0) target = $region25
    $region24: #{tpu_custom_call.1} parent=1 // pred_region
      %701 = vsyncadd [#allocation4], 0
      %s703 = sshll.u32 [#allocation7], 4
      %s704 = int_to_ptr.vmem [resolvable:$true] %s703
      %s705 = sshll.u32 %s3, 4
      %s706 = int_to_ptr.hbm [resolvable:$true] %s705
      %708 = dma.vmem_to_hbm [thread:$0]  %s704, 128, %s706, [#allocation4]
    $region25: #{tpu_custom_call.1} parent=1 // pred_fallthru
      _
    // Predicated region
    $region26: #{tpu_custom_call.1} parent=1 // pred_check
      _
    $region27: #{tpu_custom_call.1} parent=1 // pred_check_branch
      %710 = sbr.rel (0) target = $region29
    $region28: #{tpu_custom_call.1} parent=1 // pred_region
      %712 = dma.done [#allocation4], 128
    $region29: #{tpu_custom_call.1} parent=1 // pred_fallthru
      _
    %713 = vsyncpa [#allocation3], 1
    %714 = vsyncpa [#allocation6], 1
    %715 = vsyncpa [#allocation4], 1

</llo_original>
